<compile_context>
chip_gen: v6e
topology: v6e:2x2x1
jax: 0.10.0
libtpu: 0.0.40
codegen_flags: <defaults>
</compile_context>

<pallas_src>
import functools

import jax
import jax.numpy as jnp
from jax import lax
from jax.experimental import pallas as pl
from jax.experimental.pallas import tpu as pltpu

_EPS = 1e-5
_TARGET_BLOCK_BYTES = 2 * 1024 * 1024   # ~2 MiB per big f32 block (~roofline)
_MIN_GRID_STEPS = 8                     # aim for >= 8 grid steps (pipelining + megacore)
_NATIVE_V_MIN = 32                      # lane-occupancy threshold for the no-transpose path


@functools.lru_cache(maxsize=None)
def _vmem_limit_bytes():
    """Scoped-VMEM limit derived from the chip (64 MiB/core on v7x, 128 MiB v5e/v6e)."""
    cap = 64 << 20
    try:
        cap = int(getattr(pltpu.get_tpu_info(), "vmem_capacity_bytes", cap))
    except Exception:
        pass
    return int(min(max(cap // 2, 16 << 20), 64 << 20))


def _compiler_params(n_parallel_dims):
    return pltpu.CompilerParams(
        dimension_semantics=("parallel",) * n_parallel_dims,
        vmem_limit_bytes=_vmem_limit_bytes(),
    )


def _ceil_div(a, b):
    return -(-a // b)


# ----------------------------- kernels --------------------------------------

def _norm_rows_kernel(x_ref, y_ref, stats_ref):
    """x_ref: (Rb, T) rows (one row per (batch, variable)); reduce over lanes (T).

    stats_ref: (Rb, 2) with column 0 = mean, column 1 = std (merged so the tiny
    per-row outputs use one padded VMEM buffer / DMA instead of two).
    """
    x = x_ref[...].astype(jnp.float32)
    inv_t = 1.0 / x.shape[-1]
    mean = jnp.sum(x, axis=-1, keepdims=True) * inv_t            # (Rb, 1)
    xc = x - mean                                                # centered, reused
    var = jnp.sum(xc * xc, axis=-1, keepdims=True) * inv_t       # unbiased=False
    std = jnp.sqrt(var + _EPS)                                   # one EUP sqrt per row
    inv_std = 1.0 / std                                          # tiny per-row divide
    y_ref[...] = (xc * inv_std).astype(y_ref.dtype)
    col = lax.broadcasted_iota(jnp.int32, (x.shape[0], 2), 1)
    stats_ref[...] = jnp.where(col == 0, mean, std).astype(stats_ref.dtype)


def _denorm_rows_kernel(x_ref, stats_ref, y_ref):
    x = x_ref[...].astype(jnp.float32)
    s = stats_ref[...].astype(jnp.float32)                       # (Rb, 2) [mean, std]
    y_ref[...] = (x * s[:, 1:2] + s[:, 0:1]).astype(y_ref.dtype)


def _norm_btv_kernel(x_ref, y_ref, stats_ref):
    """Native-layout block: x_ref (Bb, T, Vb); reduce over axis=1 (time / sublanes)."""
    x = x_ref[...].astype(jnp.float32)
    inv_t = 1.0 / x.shape[1]
    mean = jnp.sum(x, axis=1, keepdims=True) * inv_t             # (Bb, 1, Vb)
    xc = x - mean
    var = jnp.sum(xc * xc, axis=1, keepdims=True) * inv_t
    std = jnp.sqrt(var + _EPS)
    inv_std = 1.0 / std
    y_ref[...] = (xc * inv_std).astype(y_ref.dtype)
    row = lax.broadcasted_iota(jnp.int32, (x.shape[0], 2, x.shape[2]), 1)
    stats_ref[...] = jnp.where(row == 0, mean, std).astype(stats_ref.dtype)


def _denorm_btv_kernel(x_ref, stats_ref, y_ref):
    x = x_ref[...].astype(jnp.float32)
    s = stats_ref[...].astype(jnp.float32)                       # (Bb, 2, Vb)
    y_ref[...] = (x * s[:, 1:2, :] + s[:, 0:1, :]).astype(y_ref.dtype)


# ----------------------------- tiling helpers --------------------------------

def _pick_row_block(R, T, dtype):
    """Rows per grid step for the [R, T] layout.

    Budget counts the f32 in-kernel width and the lane padding of T, targets
    ~_TARGET_BLOCK_BYTES per big buffer, keeps >= _MIN_GRID_STEPS steps when R
    allows, and keeps the block sublane-aligned for the input dtype
    (16 rows for sub-32-bit packing, else 8).
    """
    t_pad = _ceil_div(T, 128) * 128
    align = 16 if jnp.dtype(dtype).itemsize < 4 else 8
    rb = max(align, _TARGET_BLOCK_BYTES // (t_pad * 4))
    rb = min(rb, max(align, _ceil_div(R, _MIN_GRID_STEPS)))
    rb = max(align, (rb // align) * align)
    return min(rb, R)


def _pick_btv_blocks(B, T, V):
    """(batch, vars) block sizes for the native [B, T, V] layout.

    V is tiled in 128-lane chunks when it splits evenly (more grid steps for
    pipelining / megacore); otherwise the full (lane-padded) V is one block.
    """
    vb = 128 if (V % 128 == 0 and V > 128) else V
    per_b = (_ceil_div(T, 8) * 8) * (_ceil_div(vb, 128) * 128) * 4   # f32, VMEM-padded
    bb = max(1, _TARGET_BLOCK_BYTES // per_b)
    v_steps = _ceil_div(V, vb)
    want_b_steps = max(1, _ceil_div(_MIN_GRID_STEPS, v_steps))
    bb = min(bb, max(1, _ceil_div(B, want_b_steps)))
    return min(bb, B), vb


# ----------------------------- pallas_call cores ------------------------------

def _norm_rows(xr):
    R, T = xr.shape
    Rb = _pick_row_block(R, T, xr.dtype)
    big = pl.BlockSpec((Rb, T), lambda r: (r, 0))
    small = pl.BlockSpec((Rb, 2), lambda r: (r, 0))
    return pl.pallas_call(
        _norm_rows_kernel,
        out_shape=(jax.ShapeDtypeStruct((R, T), xr.dtype),
                   jax.ShapeDtypeStruct((R, 2), xr.dtype)),
        grid_spec=pltpu.PrefetchScalarGridSpec(
            num_scalar_prefetch=0,
            grid=(pl.cdiv(R, Rb),),
            in_specs=[big],
            out_specs=(big, small)),
        compiler_params=_compiler_params(1),
    )(xr)


def _denorm_rows(xr, stats):
    R, T = xr.shape
    Rb = _pick_row_block(R, T, xr.dtype)
    big = pl.BlockSpec((Rb, T), lambda r: (r, 0))
    small = pl.BlockSpec((Rb, 2), lambda r: (r, 0))
    return pl.pallas_call(
        _denorm_rows_kernel,
        out_shape=jax.ShapeDtypeStruct((R, T), xr.dtype),
        grid_spec=pltpu.PrefetchScalarGridSpec(
            num_scalar_prefetch=0,
            grid=(pl.cdiv(R, Rb),),
            in_specs=[big, small],
            out_specs=big),
        compiler_params=_compiler_params(1),
    )(xr, stats)


def _norm_btv(x):
    B, T, V = x.shape
    Bb, Vb = _pick_btv_blocks(B, T, V)
    big = pl.BlockSpec((Bb, T, Vb), lambda b, v: (b, 0, v))
    small = pl.BlockSpec((Bb, 2, Vb), lambda b, v: (b, 0, v))
    return pl.pallas_call(
        _norm_btv_kernel,
        out_shape=(jax.ShapeDtypeStruct((B, T, V), x.dtype),
                   jax.ShapeDtypeStruct((B, 2, V), x.dtype)),
        grid_spec=pltpu.PrefetchScalarGridSpec(
            num_scalar_prefetch=0,
            grid=(pl.cdiv(B, Bb), pl.cdiv(V, Vb)),
            in_specs=[big],
            out_specs=(big, small)),
        compiler_params=_compiler_params(2),
    )(x)


def _denorm_btv(x, stats):
    B, T, V = x.shape
    Bb, Vb = _pick_btv_blocks(B, T, V)
    big = pl.BlockSpec((Bb, T, Vb), lambda b, v: (b, 0, v))
    small = pl.BlockSpec((Bb, 2, Vb), lambda b, v: (b, 0, v))
    return pl.pallas_call(
        _denorm_btv_kernel,
        out_shape=jax.ShapeDtypeStruct((B, T, V), x.dtype),
        grid_spec=pltpu.PrefetchScalarGridSpec(
            num_scalar_prefetch=0,
            grid=(pl.cdiv(B, Bb), pl.cdiv(V, Vb)),
            in_specs=[big, small],
            out_specs=big),
        compiler_params=_compiler_params(2),
    )(x, stats)


# ----------------------------- public wrappers --------------------------------

def adaptive_normalize(x):
    """mode='norm' on x: [B, T, V].  Returns (x_norm, means [B,1,V], stdev [B,1,V]).

    means/stdev are returned in x.dtype, matching the PyTorch module.
    """
    B, T, V = x.shape
    if V >= _NATIVE_V_MIN:
        # Lane-dense enough natively: one HBM round trip, zero transposes.
        y, stats = _norm_btv(x)
        return y, stats[:, 0:1, :], stats[:, 1:2, :]
    # Tiny n_vars: present a lane-dense [B*V, T] slab instead.
    # TODO(synk): in a real model keep activations variables-major ([B, V, T],
    # use adaptive_normalize_bvt) or fuse these transposes into the
    # producer/consumer (e.g. CompilerParams(allow_input_fusion=...)); as
    # written they add an extra HBM round trip of x and y around a purely
    # bandwidth-bound kernel.
    xr = jnp.transpose(x, (0, 2, 1)).reshape(B * V, T)
    y, stats = _norm_rows(xr)
    y = jnp.transpose(y.reshape(B, V, T), (0, 2, 1))
    means = stats[:, 0].reshape(B, 1, V)
    stdev = stats[:, 1].reshape(B, 1, V)
    return y, means, stdev


def adaptive_denormalize(x, means, stdev):
    """mode='denorm' on x: [B, T, V] with means/stdev: [B, 1, V]."""
    B, T, V = x.shape
    if V >= _NATIVE_V_MIN:
        stats = jnp.concatenate([means, stdev], axis=1)          # (B, 2, V), tiny
        return _denorm_btv(x, stats)
    xr = jnp.transpose(x, (0, 2, 1)).reshape(B * V, T)
    stats = jnp.stack([means.reshape(B, V), stdev.reshape(B, V)], axis=-1)
    y = _denorm_rows(xr, stats.reshape(B * V, 2))
    return jnp.transpose(y.reshape(B, V, T), (0, 2, 1))


def adaptive_normalize_bvt(x_bvt):
    """Zero-transpose entry point for variables-major activations [B, V, T].

    Returns (x_norm [B,V,T], means [B,V,1], stdev [B,V,1]).  Recommended
    production path when n_vars is small.
    """
    B, V, T = x_bvt.shape
    y, stats = _norm_rows(x_bvt.reshape(B * V, T))
    return (y.reshape(B, V, T),
            stats[:, 0].reshape(B, V, 1),
            stats[:, 1].reshape(B, V, 1))


def adaptive_denormalize_bvt(x_bvt, means, stdev):
    """Zero-transpose denorm for [B, V, T] with means/stdev [B, V, 1]."""
    B, V, T = x_bvt.shape
    stats = jnp.concatenate([means, stdev], axis=-1).reshape(B * V, 2)
    y = _denorm_rows(x_bvt.reshape(B * V, T), stats)
    return y.reshape(B, V, T)


# ----------------------------- reference --------------------------------------

def _ref_norm(x, axis):
    means = jnp.mean(x, axis=axis, keepdims=True)
    var = jnp.var(x, axis=axis, keepdims=True)       # ddof=0 == unbiased=False
    stdev = jnp.sqrt(var + _EPS)
    return (x - means) / stdev, means, stdev


# ----------------------------- main -------------------------------------------

if __name__ == "__main__":
    key = jax.random.PRNGKey(0)

    # [B, T, V] cases: small n_vars (transposed [B*V, T] path, incl. a partial
    # row block) and lane-dense n_vars (native [B, T, V] path, incl. a tiled-V
    # grid and a non-multiple-of-128 V).
    for (B, T, V) in [(2, 8, 4), (4, 128, 4), (3, 96, 7),
                      (2, 64, 128), (3, 56, 48), (2, 64, 256)]:
        key, k = jax.random.split(key)
        x = jax.random.normal(k, (B, T, V), dtype=jnp.float32) * 3.0 + 1.5

        # mode='norm'
        y, means, stdev = adaptive_normalize(x)
        jax.block_until_ready(y)

        y_ref, m_ref, s_ref = _ref_norm(x, axis=1)
        assert jnp.allclose(y, y_ref, atol=1e-5, rtol=1e-4), (B, T, V)
        assert jnp.allclose(means, m_ref, atol=1e-5, rtol=1e-5), (B, T, V)
        assert jnp.allclose(stdev, s_ref, atol=1e-5, rtol=1e-5), (B, T, V)

        # mode='denorm' round trip
        x_back = adaptive_denormalize(y, means, stdev)
        jax.block_until_ready(x_back)
        assert jnp.allclose(x_back, x, atol=1e-4, rtol=1e-4), (B, T, V)

    # Variables-major [B, V, T] entry points (zero transposes end to end).
    key, k = jax.random.split(key)
    xb = jax.random.normal(k, (4, 6, 160), dtype=jnp.float32) * 2.0 - 0.5
    yb, mb, sb = adaptive_normalize_bvt(xb)
    jax.block_until_ready(yb)
    yb_ref, mb_ref, sb_ref = _ref_norm(xb, axis=2)
    assert jnp.allclose(yb, yb_ref, atol=1e-5, rtol=1e-4)
    assert jnp.allclose(mb, mb_ref, atol=1e-5, rtol=1e-5)
    assert jnp.allclose(sb, sb_ref, atol=1e-5, rtol=1e-5)
    xb_back = adaptive_denormalize_bvt(yb, mb, sb)
    jax.block_until_ready(xb_back)
    assert jnp.allclose(xb_back, xb, atol=1e-4, rtol=1e-4)

    print("KERNEL_OK")
</pallas_src>

<mosaic_0001>
module attributes {stable_mosaic.version = 11 : i64} {
  func.func @_norm_rows_kernel(%arg0: i32, %arg1: memref<8x8xf32, #tpu.memory_space<vmem>>, %arg2: memref<8x8xf32, #tpu.memory_space<vmem>>, %arg3: memref<8x2xf32, #tpu.memory_space<vmem>>) attributes {dimension_semantics = [#tpu.dimension_semantics<parallel>], iteration_bounds = array<i64: 1>, scalar_prefetch = 0 : i64, scratch_operands = 0 : i64, tpu.core_type = #tpu.core_type<tc>, window_params = [{transform_indices = @transform_0, window_bounds = array<i64: 8, 8>}, {transform_indices = @transform_1, window_bounds = array<i64: 8, 8>}, {transform_indices = @transform_2, window_bounds = array<i64: 8, 2>}]} {
    %c0 = arith.constant 0 : index
    %c0_0 = arith.constant 0 : index
    %0 = vector.load %arg1[%c0, %c0_0] : memref<8x8xf32, #tpu.memory_space<vmem>>, vector<8x8xf32>
    %cst = arith.constant dense<0.000000e+00> : vector<8xf32>
    %1 = vector.multi_reduction <add>, %0, %cst [1] : vector<8x8xf32> to vector<8xf32>
    %2 = vector.shape_cast %1 : vector<8xf32> to vector<8x1xf32>
    %cst_1 = arith.constant 1.250000e-01 : f32
    %3 = vector.broadcast %cst_1 : f32 to vector<8x1xf32>
    %4 = arith.mulf %2, %3 : vector<8x1xf32>
    %5 = vector.broadcast %4 : vector<8x1xf32> to vector<8x8xf32>
    %6 = arith.subf %0, %5 : vector<8x8xf32>
    %7 = arith.mulf %6, %6 : vector<8x8xf32>
    %cst_2 = arith.constant dense<0.000000e+00> : vector<8xf32>
    %8 = vector.multi_reduction <add>, %7, %cst_2 [1] : vector<8x8xf32> to vector<8xf32>
    %9 = vector.shape_cast %8 : vector<8xf32> to vector<8x1xf32>
    %cst_3 = arith.constant 1.250000e-01 : f32
    %10 = vector.broadcast %cst_3 : f32 to vector<8x1xf32>
    %11 = arith.mulf %9, %10 : vector<8x1xf32>
    %cst_4 = arith.constant 9.99999974E-6 : f32
    %12 = vector.broadcast %cst_4 : f32 to vector<8x1xf32>
    %13 = arith.addf %11, %12 : vector<8x1xf32>
    %14 = math.sqrt %13 : vector<8x1xf32>
    %cst_5 = arith.constant 1.000000e+00 : f32
    %15 = vector.broadcast %cst_5 : f32 to vector<8x1xf32>
    %16 = arith.divf %15, %14 : vector<8x1xf32>
    %17 = vector.broadcast %16 : vector<8x1xf32> to vector<8x8xf32>
    %18 = arith.mulf %6, %17 : vector<8x8xf32>
    %c0_6 = arith.constant 0 : index
    %c0_7 = arith.constant 0 : index
    %19 = vector.load %arg2[%c0_6, %c0_7] : memref<8x8xf32, #tpu.memory_space<vmem>>, vector<8x8xf32>
    tpu.vector_store %arg2[%c0_6, %c0_7], %18 {strides = array<i32>} : memref<8x8xf32, #tpu.memory_space<vmem>>, vector<8x8xf32>,
    %20 = tpu.iota {dimensions = array<i32: 1>} : vector<8x2xi32>
    %c0_i32 = arith.constant 0 : i32
    %21 = vector.broadcast %c0_i32 : i32 to vector<8x2xi32>
    %22 = arith.cmpi eq, %20, %21 : vector<8x2xi32>
    %23 = vector.shape_cast %4 : vector<8x1xf32> to vector<8x1xf32>
    %24 = vector.broadcast %23 : vector<8x1xf32> to vector<8x2xf32>
    %25 = vector.shape_cast %14 : vector<8x1xf32> to vector<8x1xf32>
    %26 = vector.broadcast %25 : vector<8x1xf32> to vector<8x2xf32>
    %27 = arith.select %22, %24, %26 : vector<8x2xi1>, vector<8x2xf32>
    %c0_8 = arith.constant 0 : index
    %c0_9 = arith.constant 0 : index
    %28 = vector.load %arg3[%c0_8, %c0_9] : memref<8x2xf32, #tpu.memory_space<vmem>>, vector<8x2xf32>
    tpu.vector_store %arg3[%c0_8, %c0_9], %27 {strides = array<i32>} : memref<8x2xf32, #tpu.memory_space<vmem>>, vector<8x2xf32>,
    return
  }
  func.func @transform_0(%arg0: i32) -> (i32, i32) {
    %c0_i32 = arith.constant 0 : i32
    %c0_i32_0 = arith.constant 0 : i32
    return %arg0, %c0_i32 : i32, i32
  }
  func.func @transform_1(%arg0: i32) -> (i32, i32) {
    %c0_i32 = arith.constant 0 : i32
    %c0_i32_0 = arith.constant 0 : i32
    return %arg0, %c0_i32 : i32, i32
  }
  func.func @transform_2(%arg0: i32) -> (i32, i32) {
    %c0_i32 = arith.constant 0 : i32
    %c0_i32_0 = arith.constant 0 : i32
    return %arg0, %c0_i32 : i32, i32
  }
}

</mosaic_0001>

<llo_original>
// kernel: tpu_custom_call.1
$region0: #{tpu_custom_call.1}
  #allocation0 [shape = 'u32[]', space=smem, size = 0x4, offset = 0x4, fixed_abs, tag = 'smem constant byte address 0x4 - core index']
  #allocation1 [shape = 'u32[144,128]{1,0:T(1,128)}', space=vmem, size = 0x12000, scoped, tag = 'internal scratch']
  %s0 = inlined_call_operand.hbm [shape: f32[8,8], index: 0, kind: input, shape index: {}]
  %s1 = inlined_call_operand.hbm [shape: f32[8,8], index: 1, kind: output, shape index: {0}]
  %s2 = inlined_call_operand.vmem [shape: f32[8,2], index: 2, kind: output, shape index: {1}]
  %3 = xla_tuple %s1, %s2
  %s4 = sld [smem:[#allocation0]]
  $region26: #{tpu_custom_call.1} parent=0
    _
  %s6 = ssub.s32 1, %s4
  %s7 = scalar_select 0, %s6, %s4
  $region1: #{tpu_custom_call.1} parent=0
    #allocation2 [shape = 'u8[4096]{0}', space=vmem, size = 0x1000, scoped, tag = 'input window, operand 0, single buffered']
    #allocation3 [shape = 's32[1]{0}', space=sflag, size = 0x4, scoped, tag = 'scoped memory for tpu_custom_call.1']
    #allocation4 [shape = 's32[1]{0}', space=sflag, size = 0x4, scoped, tag = 'scoped memory for tpu_custom_call.1']
    #allocation5 [shape = 'u8[4096]{0}', space=vmem, size = 0x1000, scoped, tag = 'output window, operand 0, single buffered']
    %8 = vsyncpa [#allocation3], 0
    %9 = vsyncpa [#allocation4], 0
    // Predicated region
    $region2: #{tpu_custom_call.1} parent=1 // pred_check
      _
    $region3: #{tpu_custom_call.1} parent=1 // pred_check_branch
      %11 = sbr.rel (0) target = $region5
    $region4: #{tpu_custom_call.1} parent=1 // pred_region
      %s13 = ssub.s32 128, 128
      %14 = vsyncadd [#allocation3], %s13
      %s16 = sshll.u32 [#allocation2], 4
      %s17 = int_to_ptr.vmem [resolvable:$true] %s16
      %19 = dma.hbm_to_vmem [thread:$0]  %s0, 128, %s17, [#allocation3]
    $region5: #{tpu_custom_call.1} parent=1 // pred_fallthru
      _
    // Predicated region
    $region6: #{tpu_custom_call.1} parent=1 // pred_check
      _
    $region7: #{tpu_custom_call.1} parent=1 // pred_check_branch
      %21 = sbr.rel (0) target = $region9
    $region8: #{tpu_custom_call.1} parent=1 // pred_region
      %22 = dma.done [#allocation3], 128
    $region9: #{tpu_custom_call.1} parent=1 // pred_fallthru
      _
    %v23 = vld [vmem:[#allocation2] sm:$0xff]
    %vm24 = vcmask 64512
    %v25 = vsel %vm24, %v23, 0.0
    %26 = vadd.xlane.f32.xlu0 %v25
    %v27 = vpop.xlane.xlu0 %26
    %v28 = vmul.f32 %v27, 0.125
    %v29 = vsub.f32 %v23, %v28
    %v30 = vmul.f32 %v29, %v29
    %v31 = vsel %vm24, %v30, 0.0
    %32 = vadd.xlane.f32.xlu0 %v31
    %v33 = vpop.xlane.xlu0 %32
    %v34 = vmul.f32 %v33, 0.125
    %v35 = vadd.f32 %v34, 1e-05
    %v36 = vrsqrt.pop %v35
    %v37 = vmul.f32 %v35, %v36
    %vm38 = vcmp.eq.f32.partialorder %v35, inf
    %v39 = vsel %vm38, %v35, %v37
    %vm40 = vcmp.eq.f32.partialorder %v35, 0.0
    %v41 = vand.u32 %v35, 2147483648
    %v42 = vsel %vm40, %v41, %v39
    %v43 = vrcp.pop %v42
    %v44 = vmul.f32 1.0, %v43
    %v45 = vmul.f32 %v29, %v44
    %46 = vst.msk [vmem:[#allocation5] sm:$0xff] %vm24, %v45
    %v47 = vlaneseq
    %v48 = vand.u32 %v47, 127
    %vm49 = vcmp.eq.s32.totalorder %v48, 0
    %v50 = vsel %vm49, %v28, %v42
    %vm51 = vcmask 15360
    %52 = vst.msk [vmem:[%s2] sm:$0xff] %vm51, %v50
    // Predicated region
    $region10: #{tpu_custom_call.1} parent=1 // pred_check
      _
    $region11: #{tpu_custom_call.1} parent=1 // pred_check_branch
      %54 = sbr.rel (0) target = $region13
    $region12: #{tpu_custom_call.1} parent=1 // pred_region
      %s56 = ssub.s32 128, 128
      %57 = vsyncadd [#allocation4], %s56
      %s59 = sshll.u32 [#allocation5], 4
      %s60 = int_to_ptr.vmem [resolvable:$true] %s59
      %62 = dma.vmem_to_hbm [thread:$0]  %s60, 128, %s1, [#allocation4]
    $region13: #{tpu_custom_call.1} parent=1 // pred_fallthru
      _
    // Predicated region
    $region14: #{tpu_custom_call.1} parent=1 // pred_check
      _
    $region15: #{tpu_custom_call.1} parent=1 // pred_check_branch
      %64 = sbr.rel (0) target = $region17
    $region16: #{tpu_custom_call.1} parent=1 // pred_region
      _
    $region17: #{tpu_custom_call.1} parent=1 // pred_fallthru
      _
    // Predicated region
    $region18: #{tpu_custom_call.1} parent=1 // pred_check
      _
    $region19: #{tpu_custom_call.1} parent=1 // pred_check_branch
      %66 = sbr.rel (0) target = $region21
    $region20: #{tpu_custom_call.1} parent=1 // pred_region
      %67 = dma.done [#allocation4], 128
    $region21: #{tpu_custom_call.1} parent=1 // pred_fallthru
      _
    // Predicated region
    $region22: #{tpu_custom_call.1} parent=1 // pred_check
      _
    $region23: #{tpu_custom_call.1} parent=1 // pred_check_branch
      %69 = sbr.rel (0) target = $region25
    $region24: #{tpu_custom_call.1} parent=1 // pred_region
      _
    $region25: #{tpu_custom_call.1} parent=1 // pred_fallthru
      _
    %70 = vsyncpa [#allocation3], 1
    %71 = vsyncpa [#allocation4], 1

</llo_original>
